<compile_context>
chip_gen: v7x
topology: tpu7x:2x2x1
jax: 0.10.0
libtpu: 0.0.40
codegen_flags: <defaults>
</compile_context>

<pallas_src>
import functools

import jax
import jax.numpy as jnp
from jax.experimental import pallas as pl
from jax.experimental.pallas import tpu as pltpu

EPS = 1e-5   # torch.nn.InstanceNorm2d default eps


def _round_up(x, m):
    return (x + m - 1) // m * m


def _conv_in_act_kernel(x_ref, w_ref, g_ref, beta_ref, o_ref, *,
                        K, W, Wo, P_real, P_pad, inv_count, activation):
    # x_ref    : (Cin_pad, L_pad)     flattened + zero-padded image (batch squeezed)
    # w_ref    : (Cout, K*K*Cin_pad)  folded conv weight, rows ordered (ky, kx, cin)
    # g_ref    : (Cout, 1)            instance-norm gamma (f32)
    # beta_ref : (Cout, 1)            instance-norm beta  (f32)
    # o_ref    : (Cout, P_pad)

    # ---- Convolution: ONE accumulating MXU matmul over stacked shifted taps ----
    taps = []
    for ky in range(K):
        for kx in range(K):
            s = ky * W + kx                               # static lane offset
            taps.append(x_ref[:, pl.ds(s, P_pad)])        # (Cin_pad, P_pad)
    rhs = jnp.concatenate(taps, axis=0)                   # (K*K*Cin_pad, P_pad)
    acc = jnp.dot(w_ref[...], rhs,
                  preferred_element_type=jnp.float32)     # (Cout, P_pad) f32
    # NOTE: Conv2d bias intentionally omitted -- InstanceNorm's mean subtraction
    # cancels any per-channel constant exactly (valid only because norm follows).

    # ---- InstanceNorm2d (biased var) + affine, single masked pass ----
    # Validity mask built in-kernel (no HBM mask input): flat position p maps to
    # (oh, ow) = (p // W, p % W); valid iff p < Ho*W and ow < Wo.
    col = jax.lax.broadcasted_iota(jnp.int32, (1, P_pad), 1)
    mask = ((col < P_real) & ((col % W) < Wo)).astype(jnp.float32)   # (1, P_pad)

    am = acc * mask
    s1 = jnp.sum(am, axis=1, keepdims=True)               # (Cout, 1)
    s2 = jnp.sum(am * acc, axis=1, keepdims=True)         # masked sum of acc^2
    mean = s1 * inv_count
    # NOTE: single-pass E[x^2]-mean^2 can cancel badly if |mean| >> std; fine for
    # f32 conv activations at these scales (stats stay f32 even on the bf16 path).
    var = jnp.maximum(s2 * inv_count - mean * mean, 0.0)
    scale = g_ref[...] * jax.lax.rsqrt(var + EPS)          # (Cout, 1)
    shift = beta_ref[...] - mean * scale
    y = acc * scale + shift

    # ---- Activation ----
    if activation == "ReLU":
        y = jnp.maximum(y, 0.0)
    elif activation == "ReLU6":
        y = jnp.clip(y, 0.0, 6.0)
    elif activation == "Hardtanh":
        y = jnp.clip(y, 0.0, 1.0)      # spec: Hardtanh(min_val=0.0, max_val=1.0)
    elif activation == "Sigmoid":
        y = jax.nn.sigmoid(y)
    elif activation in ("ELU", "CELU"):   # alpha = 1.0 -> identical
        y = jnp.where(y > 0.0, y, jnp.exp(y) - 1.0)
    elif activation == "SELU":
        a, sc = 1.6732632423543772, 1.0507009873554805
        y = sc * jnp.where(y > 0.0, y, a * (jnp.exp(y) - 1.0))
    elif activation != "None":
        # TODO(synk): PReLU / RReLU need a learned / randomized per-channel slope input.
        raise NotImplementedError(activation)

    o_ref[...] = y.astype(o_ref.dtype)


def conv_block_forward(x, w, b, gamma, beta, *, activation="None",
                       compute_dtype=None, crop_output=True):
    """ConvBlock forward.

    x: (N, Cin, H, W) NCHW; w: (Cout, Cin, K, K); b/gamma/beta: (Cout,).
    Conv is valid (no padding), stride 1.  The conv bias `b` is accepted for API
    fidelity but unused: it is exactly cancelled by the instance norm.
    `compute_dtype=jnp.bfloat16` feeds bf16 operands to the MXU (f32 accumulate
    and f32 norm/activation math).  `crop_output=False` returns the lane-dense
    padded flat layout (N, Cout, P_pad) for fused downstream consumers.
    Returns (N, Cout, H-K+1, W-K+1) when crop_output=True.
    """
    del b  # cancelled by InstanceNorm mean subtraction
    N, Cin, H, W = x.shape
    Cout, _, K, K2 = w.shape
    assert K == K2
    # TODO(synk): only stride=1 (the module's default) is implemented.
    Ho, Wo = H - K + 1, W - K + 1
    if compute_dtype is None:
        compute_dtype = x.dtype

    Cin_pad = _round_up(Cin, 8)              # sublane-aligned tap stacking
    P_real = Ho * W                          # flat output grid incl. (W-Wo) wrap cols/row
    P_pad = _round_up(P_real, 128)           # lane-dense output stores
    max_shift = (K - 1) * W + (K - 1)
    L_pad = _round_up(max_shift + P_pad, 128)

    x_flat = jnp.pad(x.reshape(N, Cin, H * W),
                     ((0, 0), (0, Cin_pad - Cin), (0, L_pad - H * W)))
    x_flat = x_flat.astype(compute_dtype)

    # Fold all K*K taps into the weight's contraction axis, ordered (ky, kx, cin)
    # to match the in-kernel tap stacking; zero-pad cin to Cin_pad.
    w_p = jnp.pad(w, ((0, 0), (0, Cin_pad - Cin), (0, 0), (0, 0)))
    w2 = jnp.transpose(w_p, (0, 2, 3, 1)).reshape(Cout, K * K * Cin_pad)
    w2 = w2.astype(compute_dtype)

    g2 = gamma.reshape(Cout, 1).astype(jnp.float32)
    beta2 = beta.reshape(Cout, 1).astype(jnp.float32)

    kernel = functools.partial(
        _conv_in_act_kernel, K=K, W=W, Wo=Wo, P_real=P_real, P_pad=P_pad,
        inv_count=1.0 / float(Ho * Wo), activation=activation)

    out_flat = pl.pallas_call(
        kernel,
        out_shape=jax.ShapeDtypeStruct((N, Cout, P_pad), x.dtype),
        grid_spec=pltpu.PrefetchScalarGridSpec(
            num_scalar_prefetch=0,
            grid=(N,),
            in_specs=[
                pl.BlockSpec((None, Cin_pad, L_pad), lambda n: (n, 0, 0)),
                pl.BlockSpec((Cout, K * K * Cin_pad), lambda n: (0, 0)),
                pl.BlockSpec((Cout, 1), lambda n: (0, 0)),
                pl.BlockSpec((Cout, 1), lambda n: (0, 0)),
            ],
            out_specs=pl.BlockSpec((None, Cout, P_pad), lambda n: (n, 0, 0)),
        ),
        compiler_params=pltpu.CompilerParams(
            dimension_semantics=("parallel",),
            vmem_limit_bytes=32 * 1024 * 1024),
    )(x_flat, w2, g2, beta2)

    if not crop_output:
        return out_flat
    # Boundary crop: only materialize the NCHW tensor at the model boundary.
    out = out_flat[:, :, :P_real].reshape(N, Cout, Ho, W)[:, :, :, :Wo]
    return out


def _reference_forward(x, w, b, gamma, beta, *, activation):
    y = jax.lax.conv_general_dilated(
        x, w, window_strides=(1, 1), padding="VALID",
        dimension_numbers=("NCHW", "OIHW", "NCHW"))
    y = y + b[None, :, None, None]
    mean = y.mean(axis=(2, 3), keepdims=True)
    var = ((y - mean) ** 2).mean(axis=(2, 3), keepdims=True)
    y = (y - mean) / jnp.sqrt(var + EPS)
    y = y * gamma[None, :, None, None] + beta[None, :, None, None]
    if activation == "ReLU":
        y = jnp.maximum(y, 0.0)
    return y


if __name__ == "__main__":
    # ConvBlock(in_channels=4, out_channels=8, kernel_size=3, stride=1, ...)
    N, Cin, H, W = 2, 4, 16, 16
    Cout, K = 8, 3

    key = jax.random.PRNGKey(0)
    kx, kw, kb, kg, kbt = jax.random.split(key, 5)

    x = jax.random.normal(kx, (N, Cin, H, W), dtype=jnp.float32)

    # Deterministic parameter init (PyTorch-default-like scales); gamma/beta
    # randomized away from (1, 0) to exercise the affine path.
    fan_in = Cin * K * K
    bound = 1.0 / (fan_in ** 0.5)
    w = jax.random.uniform(kw, (Cout, Cin, K, K), jnp.float32, -bound, bound)
    b = jax.random.uniform(kb, (Cout,), jnp.float32, -bound, bound)
    gamma = 1.0 + 0.1 * jax.random.normal(kg, (Cout,), dtype=jnp.float32)
    beta = 0.1 * jax.random.normal(kbt, (Cout,), dtype=jnp.float32)

    # 1) f32 MXU path, default activation ('None') -- strict check.
    out = conv_block_forward(x, w, b, gamma, beta, activation="None")
    out = jax.block_until_ready(out)
    ref = _reference_forward(x, w, b, gamma, beta, activation="None")
    assert out.shape == (N, Cout, H - K + 1, W - K + 1), out.shape
    err = float(jnp.max(jnp.abs(out - ref)))
    assert err < 1e-4, f"f32 path: max abs error too large: {err}"

    # 2) ReLU activation, f32 path -- strict check.
    out_r = jax.block_until_ready(
        conv_block_forward(x, w, b, gamma, beta, activation="ReLU"))
    ref_r = _reference_forward(x, w, b, gamma, beta, activation="ReLU")
    err_r = float(jnp.max(jnp.abs(out_r - ref_r)))
    assert err_r < 1e-4, f"ReLU path: max abs error too large: {err_r}"

    # 3) bf16-into-MXU path (f32 stats/epilogue) -- loose check.
    out_bf = jax.block_until_ready(
        conv_block_forward(x, w, b, gamma, beta, activation="None",
                           compute_dtype=jnp.bfloat16))
    err_bf = float(jnp.max(jnp.abs(out_bf - ref)))
    assert err_bf < 1e-1, f"bf16 path: max abs error too large: {err_bf}"

    print("KERNEL_OK")
</pallas_src>

<mosaic_0001>
module attributes {stable_mosaic.version = 11 : i64} {
  func.func @_conv_in_act_kernel(%arg0: i32, %arg1: memref<1x8x384xf32, #tpu.memory_space<vmem>>, %arg2: memref<8x72xf32, #tpu.memory_space<vmem>>, %arg3: memref<8x1xf32, #tpu.memory_space<vmem>>, %arg4: memref<8x1xf32, #tpu.memory_space<vmem>>, %arg5: memref<1x8x256xf32, #tpu.memory_space<vmem>>) attributes {dimension_semantics = [#tpu.dimension_semantics<parallel>], iteration_bounds = array<i64: 2>, scalar_prefetch = 0 : i64, scratch_operands = 0 : i64, tpu.core_type = #tpu.core_type<tc>, window_params = [{transform_indices = @transform_0, window_bounds = array<i64: 1, 8, 384>}, {pipeline_mode = #tpu.pipeline_mode<synchronous>, transform_indices = @transform_1, window_bounds = array<i64: 8, 72>}, {pipeline_mode = #tpu.pipeline_mode<synchronous>, transform_indices = @transform_2, window_bounds = array<i64: 8, 1>}, {pipeline_mode = #tpu.pipeline_mode<synchronous>, transform_indices = @transform_3, window_bounds = array<i64: 8, 1>}, {transform_indices = @transform_4, window_bounds = array<i64: 1, 8, 256>}]} {
    %c0 = arith.constant 0 : index
    %c0_0 = arith.constant 0 : index
    %c0_1 = arith.constant 0 : index
    %0 = vector.load %arg1[%c0, %c0_0, %c0_1] : memref<1x8x384xf32, #tpu.memory_space<vmem>>, vector<1x8x256xf32>
    %1 = vector.shape_cast %0 : vector<1x8x256xf32> to vector<8x256xf32>
    %c0_2 = arith.constant 0 : index
    %c0_3 = arith.constant 0 : index
    %c1 = arith.constant 1 : index
    %2 = vector.load %arg1[%c0_2, %c0_3, %c1] : memref<1x8x384xf32, #tpu.memory_space<vmem>>, vector<1x8x256xf32>
    %3 = vector.shape_cast %2 : vector<1x8x256xf32> to vector<8x256xf32>
    %c0_4 = arith.constant 0 : index
    %c0_5 = arith.constant 0 : index
    %c2 = arith.constant 2 : index
    %4 = vector.load %arg1[%c0_4, %c0_5, %c2] : memref<1x8x384xf32, #tpu.memory_space<vmem>>, vector<1x8x256xf32>
    %5 = vector.shape_cast %4 : vector<1x8x256xf32> to vector<8x256xf32>
    %c0_6 = arith.constant 0 : index
    %c0_7 = arith.constant 0 : index
    %c16 = arith.constant 16 : index
    %6 = vector.load %arg1[%c0_6, %c0_7, %c16] : memref<1x8x384xf32, #tpu.memory_space<vmem>>, vector<1x8x256xf32>
    %7 = vector.shape_cast %6 : vector<1x8x256xf32> to vector<8x256xf32>
    %c0_8 = arith.constant 0 : index
    %c0_9 = arith.constant 0 : index
    %c17 = arith.constant 17 : index
    %8 = vector.load %arg1[%c0_8, %c0_9, %c17] : memref<1x8x384xf32, #tpu.memory_space<vmem>>, vector<1x8x256xf32>
    %9 = vector.shape_cast %8 : vector<1x8x256xf32> to vector<8x256xf32>
    %c0_10 = arith.constant 0 : index
    %c0_11 = arith.constant 0 : index
    %c18 = arith.constant 18 : index
    %10 = vector.load %arg1[%c0_10, %c0_11, %c18] : memref<1x8x384xf32, #tpu.memory_space<vmem>>, vector<1x8x256xf32>
    %11 = vector.shape_cast %10 : vector<1x8x256xf32> to vector<8x256xf32>
    %c0_12 = arith.constant 0 : index
    %c0_13 = arith.constant 0 : index
    %c32 = arith.constant 32 : index
    %12 = vector.load %arg1[%c0_12, %c0_13, %c32] : memref<1x8x384xf32, #tpu.memory_space<vmem>>, vector<1x8x256xf32>
    %13 = vector.shape_cast %12 : vector<1x8x256xf32> to vector<8x256xf32>
    %c0_14 = arith.constant 0 : index
    %c0_15 = arith.constant 0 : index
    %c33 = arith.constant 33 : index
    %14 = vector.load %arg1[%c0_14, %c0_15, %c33] : memref<1x8x384xf32, #tpu.memory_space<vmem>>, vector<1x8x256xf32>
    %15 = vector.shape_cast %14 : vector<1x8x256xf32> to vector<8x256xf32>
    %c0_16 = arith.constant 0 : index
    %c0_17 = arith.constant 0 : index
    %c34 = arith.constant 34 : index
    %16 = vector.load %arg1[%c0_16, %c0_17, %c34] : memref<1x8x384xf32, #tpu.memory_space<vmem>>, vector<1x8x256xf32>
    %17 = vector.shape_cast %16 : vector<1x8x256xf32> to vector<8x256xf32>
    %18 = tpu.concatenate %1, %3, %5, %7, %9, %11, %13, %15, %17 in 0 : vector<8x256xf32>, vector<8x256xf32>, vector<8x256xf32>, vector<8x256xf32>, vector<8x256xf32>, vector<8x256xf32>, vector<8x256xf32>, vector<8x256xf32>, vector<8x256xf32> -> vector<72x256xf32>
    %c0_18 = arith.constant 0 : index
    %c0_19 = arith.constant 0 : index
    %19 = vector.load %arg2[%c0_18, %c0_19] : memref<8x72xf32, #tpu.memory_space<vmem>>, vector<8x72xf32>
    %cst = arith.constant dense<0.000000e+00> : vector<8x256xf32>
    %20 = tpu.matmul %19, %18, %cst {dimension_numbers = #tpu.dot_dimension_numbers<[1], [0], [0], [1], [0, 0, 1, 1], [], []>} : vector<8x72xf32>, vector<72x256xf32>, vector<8x256xf32> -> vector<8x256xf32>
    %21 = tpu.iota {dimensions = array<i32: 1>} : vector<1x256xi32>
    %c224_i32 = arith.constant 224 : i32
    %22 = vector.broadcast %c224_i32 : i32 to vector<1x256xi32>
    %23 = arith.cmpi slt, %21, %22 : vector<1x256xi32>
    %c16_i32 = arith.constant 16 : i32
    %c0_i32 = arith.constant 0 : i32
    %24 = arith.cmpi eq, %c16_i32, %c0_i32 : i32
    %c1_i32 = arith.constant 1 : i32
    %25 = arith.select %24, %c1_i32, %c16_i32 : i32
    %26 = vector.broadcast %25 : i32 to vector<1x256xi32>
    %27 = arith.remsi %21, %26 : vector<1x256xi32>
    %c0_i32_20 = arith.constant 0 : i32
    %28 = vector.broadcast %c0_i32_20 : i32 to vector<1x256xi32>
    %29 = arith.cmpi ne, %27, %28 : vector<1x256xi32>
    %c0_i32_21 = arith.constant 0 : i32
    %30 = vector.broadcast %c0_i32_21 : i32 to vector<1x256xi32>
    %31 = arith.cmpi slt, %27, %30 : vector<1x256xi32>
    %c0_i32_22 = arith.constant 0 : i32
    %32 = arith.cmpi slt, %25, %c0_i32_22 : i32
    %33 = vector.broadcast %32 : i1 to vector<1x256xi1>
    %34 = vector.broadcast %33 : vector<1x256xi1> to vector<1x256xi1>
    %35 = arith.xori %31, %34 : vector<1x256xi1>
    %36 = arith.andi %35, %29 : vector<1x256xi1>
    %37 = vector.broadcast %25 : i32 to vector<1x256xi32>
    %38 = arith.addi %27, %37 : vector<1x256xi32>
    %39 = arith.select %36, %38, %27 : vector<1x256xi1>, vector<1x256xi32>
    %c14_i32 = arith.constant 14 : i32
    %40 = vector.broadcast %c14_i32 : i32 to vector<1x256xi32>
    %41 = arith.cmpi slt, %39, %40 : vector<1x256xi32>
    %42 = arith.andi %23, %41 : vector<1x256xi1>
    %43 = arith.extui %42 : vector<1x256xi1> to vector<1x256xi32>
    %44 = arith.sitofp %43 : vector<1x256xi32> to vector<1x256xf32>
    %45 = vector.broadcast %44 : vector<1x256xf32> to vector<8x256xf32>
    %46 = arith.mulf %20, %45 : vector<8x256xf32>
    %cst_23 = arith.constant dense<0.000000e+00> : vector<8xf32>
    %47 = vector.multi_reduction <add>, %46, %cst_23 [1] : vector<8x256xf32> to vector<8xf32>
    %48 = vector.shape_cast %47 : vector<8xf32> to vector<8x1xf32>
    %49 = arith.mulf %46, %20 : vector<8x256xf32>
    %cst_24 = arith.constant dense<0.000000e+00> : vector<8xf32>
    %50 = vector.multi_reduction <add>, %49, %cst_24 [1] : vector<8x256xf32> to vector<8xf32>
    %51 = vector.shape_cast %50 : vector<8xf32> to vector<8x1xf32>
    %cst_25 = arith.constant 0.00510204071 : f32
    %52 = vector.broadcast %cst_25 : f32 to vector<8x1xf32>
    %53 = arith.mulf %48, %52 : vector<8x1xf32>
    %cst_26 = arith.constant 0.00510204071 : f32
    %54 = vector.broadcast %cst_26 : f32 to vector<8x1xf32>
    %55 = arith.mulf %51, %54 : vector<8x1xf32>
    %56 = arith.mulf %53, %53 : vector<8x1xf32>
    %57 = arith.subf %55, %56 : vector<8x1xf32>
    %cst_27 = arith.constant 0.000000e+00 : f32
    %58 = vector.broadcast %cst_27 : f32 to vector<8x1xf32>
    %59 = arith.maximumf %57, %58 : vector<8x1xf32>
    %c0_28 = arith.constant 0 : index
    %c0_29 = arith.constant 0 : index
    %60 = vector.load %arg3[%c0_28, %c0_29] : memref<8x1xf32, #tpu.memory_space<vmem>>, vector<8x1xf32>
    %cst_30 = arith.constant 9.99999974E-6 : f32
    %61 = vector.broadcast %cst_30 : f32 to vector<8x1xf32>
    %62 = arith.addf %59, %61 : vector<8x1xf32>
    %63 = math.rsqrt %62 : vector<8x1xf32>
    %64 = arith.mulf %60, %63 : vector<8x1xf32>
    %c0_31 = arith.constant 0 : index
    %c0_32 = arith.constant 0 : index
    %65 = vector.load %arg4[%c0_31, %c0_32] : memref<8x1xf32, #tpu.memory_space<vmem>>, vector<8x1xf32>
    %66 = arith.mulf %53, %64 : vector<8x1xf32>
    %67 = arith.subf %65, %66 : vector<8x1xf32>
    %68 = vector.broadcast %64 : vector<8x1xf32> to vector<8x256xf32>
    %69 = arith.mulf %20, %68 : vector<8x256xf32>
    %70 = vector.broadcast %67 : vector<8x1xf32> to vector<8x256xf32>
    %71 = arith.addf %69, %70 : vector<8x256xf32>
    %c0_33 = arith.constant 0 : index
    %c0_34 = arith.constant 0 : index
    %c0_35 = arith.constant 0 : index
    %72 = vector.load %arg5[%c0_33, %c0_34, %c0_35] : memref<1x8x256xf32, #tpu.memory_space<vmem>>, vector<1x8x256xf32>
    %73 = vector.shape_cast %72 : vector<1x8x256xf32> to vector<8x256xf32>
    %74 = vector.shape_cast %71 : vector<8x256xf32> to vector<1x8x256xf32>
    tpu.vector_store %arg5[%c0_33, %c0_34, %c0_35], %74 {strides = array<i32>} : memref<1x8x256xf32, #tpu.memory_space<vmem>>, vector<1x8x256xf32>,
    return
  }
  func.func @transform_0(%arg0: i32) -> (i32, i32, i32) {
    %c0_i32 = arith.constant 0 : i32
    %c0_i32_0 = arith.constant 0 : i32
    %c0_i32_1 = arith.constant 0 : i32
    return %arg0, %c0_i32, %c0_i32_0 : i32, i32, i32
  }
  func.func @transform_1(%arg0: i32) -> (i32, i32) {
    %c0_i32 = arith.constant 0 : i32
    %c0_i32_0 = arith.constant 0 : i32
    %c0_i32_1 = arith.constant 0 : i32
    return %c0_i32, %c0_i32_0 : i32, i32
  }
  func.func @transform_2(%arg0: i32) -> (i32, i32) {
    %c0_i32 = arith.constant 0 : i32
    %c0_i32_0 = arith.constant 0 : i32
    %c0_i32_1 = arith.constant 0 : i32
    return %c0_i32, %c0_i32_0 : i32, i32
  }
  func.func @transform_3(%arg0: i32) -> (i32, i32) {
    %c0_i32 = arith.constant 0 : i32
    %c0_i32_0 = arith.constant 0 : i32
    %c0_i32_1 = arith.constant 0 : i32
    return %c0_i32, %c0_i32_0 : i32, i32
  }
  func.func @transform_4(%arg0: i32) -> (i32, i32, i32) {
    %c0_i32 = arith.constant 0 : i32
    %c0_i32_0 = arith.constant 0 : i32
    %c0_i32_1 = arith.constant 0 : i32
    return %arg0, %c0_i32, %c0_i32_0 : i32, i32, i32
  }
}

</mosaic_0001>

<llo_original>
// kernel: tpu_custom_call.1
$region0: #{tpu_custom_call.1}
  #allocation0 [shape = 'u32[]', space=smem, size = 0x4, offset = 0x4, fixed_abs, tag = 'smem constant byte address 0x4 - core index']
  #allocation1 [shape = 'u32[144,128]{1,0:T(1,128)}', space=vmem, size = 0x12000, scoped, tag = 'internal scratch']
  %s0 = inlined_call_operand.hbm [shape: f32[2,8,384], index: 0, kind: input, shape index: {}]
  %s1 = inlined_call_operand.vmem [shape: f32[8,72], index: 1, kind: input, shape index: {}]
  %s2 = inlined_call_operand.vmem [shape: f32[8,1], index: 2, kind: input, shape index: {}]
  %s3 = inlined_call_operand.vmem [shape: f32[8,1], index: 3, kind: input, shape index: {}]
  %s4 = inlined_call_operand.hbm [shape: f32[2,8,256], index: 4, kind: output, shape index: {}]
  %s5 = sld [smem:[#allocation0]]
  $region53: #{tpu_custom_call.1} parent=0
    _
  %s7 = ssub.s32 1, %s5
  %s8 = scalar_select 0, %s7, %s5
  $region1: #{tpu_custom_call.1} parent=0
    #allocation2 [shape = 'u8[24576]{0}', space=vmem, size = 0x6000, scoped, tag = 'input window, operand 0']
    #allocation3 [shape = 's32[2]{0}', space=sflag, size = 0x8, scoped, tag = 'scoped memory for tpu_custom_call.1']
    #allocation4 [shape = 's32[2]{0}', space=sflag, size = 0x8, scoped, tag = 'scoped memory for tpu_custom_call.1']
    #allocation5 [shape = 'u8[16384]{0}', space=vmem, size = 0x4000, scoped, tag = 'output window, operand 0']
    %9 = vsyncpa [#allocation3], 0
    %s10 = scalar_lea.sflag [#allocation3], 1
    %11 = vsyncpa %s10, 0
    %12 = vsyncpa [#allocation4], 0
    %s13 = scalar_lea.sflag [#allocation4], 1
    %14 = vsyncpa %s13, 0
    loop: start=0, step=1, limit=4
    $region2: #{tpu_custom_call.1} parent=1 // loop_pre_header
      _
    $region3: #{tpu_custom_call.1} parent=1 // loop_header
      %s16 = sphi 0, %s20
      %p17 = scmp.ge.s32.totalorder %s16, 4
      %s26 = sphi 0, %s28
      %s29 = sphi 0, %s26
      %s30 = sphi 0, %s29
      %s46 = sphi 0, %s30
      %s50 = sphi 0, %s50
      %s52 = sphi 0, %s50
      %s53 = sphi 0, %s52
      %s67 = sphi 0, %s53
      %s71 = sphi 0, %s71
      %s73 = sphi 0, %s71
      %s74 = sphi 0, %s73
      %s88 = sphi 0, %s74
      %s92 = sphi 0, %s92
      %s94 = sphi 0, %s92
      %s95 = sphi 0, %s94
      %s109 = sphi 0, %s95
      %s115 = sphi 0, %s117
      %s118 = sphi 0, %s115
      %s119 = sphi 0, %s118
      %s135 = sphi 0, %s119
    $region4: #{tpu_custom_call.1} parent=1 // loop_header_branch
      %19 = sbr.rel (%p17) target = $region8
    $region5: #{tpu_custom_call.1} parent=1 // loop_body
      %s21 = ssub.s32 %s16, 1
      %s22 = ssub.s32 %s16, 2
      %s23 = sadd.s32 %s16, 1
      %s24 = ssub.s32 %s16, %s23
      %p25 = scmp.eq.s32.totalorder %s24, 0
      %s27 = sadd.s32 %s26, 1
      %s28 = scalar_select %p25, %s26, %s27
      %p31 = pneg %p25
      %p32 = scmp.eq.s32.totalorder %s16, 1
      %p33 = por %p31, %p32
      %p34 = scmp.ne.s32.totalorder %s26, %s29
      %p35 = scmp.eq.s32.totalorder %s16, 0
      %p36 = por %p34, %p35
      %p37 = scmp.ne.s32.totalorder %s26, %s29
      %p38 = scmp.eq.s32.totalorder %s21, 1
      %p39 = por %p37, %p38
      %p40 = scmp.ne.s32.totalorder %s29, %s30
      %p41 = scmp.eq.s32.totalorder %s21, 0
      %p42 = por %p40, %p41
      %p43 = scmp.ne.s32.totalorder %s29, %s30
      %p44 = scmp.eq.s32.totalorder %s22, 1
      %p45 = por %p43, %p44
      %p47 = scmp.ne.s32.totalorder %s30, %s46
      %p48 = scmp.eq.s32.totalorder %s22, 0
      %p49 = por %p47, %p48
      %s51 = sadd.s32 %s50, 1
      %p54 = scmp.eq.s32.totalorder %s16, 1
      %p55 = scmp.ne.s32.totalorder %s50, %s52
      %p56 = scmp.eq.s32.totalorder %s16, 0
      %p57 = por %p55, %p56
      %p58 = scmp.ne.s32.totalorder %s50, %s52
      %p59 = scmp.eq.s32.totalorder %s21, 1
      %p60 = por %p58, %p59
      %p61 = scmp.ne.s32.totalorder %s52, %s53
      %p62 = scmp.eq.s32.totalorder %s21, 0
      %p63 = por %p61, %p62
      %p64 = scmp.ne.s32.totalorder %s52, %s53
      %p65 = scmp.eq.s32.totalorder %s22, 1
      %p66 = por %p64, %p65
      %p68 = scmp.ne.s32.totalorder %s53, %s67
      %p69 = scmp.eq.s32.totalorder %s22, 0
      %p70 = por %p68, %p69
      %s72 = sadd.s32 %s71, 1
      %p75 = scmp.eq.s32.totalorder %s16, 1
      %p76 = scmp.ne.s32.totalorder %s71, %s73
      %p77 = scmp.eq.s32.totalorder %s16, 0
      %p78 = por %p76, %p77
      %p79 = scmp.ne.s32.totalorder %s71, %s73
      %p80 = scmp.eq.s32.totalorder %s21, 1
      %p81 = por %p79, %p80
      %p82 = scmp.ne.s32.totalorder %s73, %s74
      %p83 = scmp.eq.s32.totalorder %s21, 0
      %p84 = por %p82, %p83
      %p85 = scmp.ne.s32.totalorder %s73, %s74
      %p86 = scmp.eq.s32.totalorder %s22, 1
      %p87 = por %p85, %p86
      %p89 = scmp.ne.s32.totalorder %s74, %s88
      %p90 = scmp.eq.s32.totalorder %s22, 0
      %p91 = por %p89, %p90
      %s93 = sadd.s32 %s92, 1
      %p96 = scmp.eq.s32.totalorder %s16, 1
      %p97 = scmp.ne.s32.totalorder %s92, %s94
      %p98 = scmp.eq.s32.totalorder %s16, 0
      %p99 = por %p97, %p98
      %p100 = scmp.ne.s32.totalorder %s92, %s94
      %p101 = scmp.eq.s32.totalorder %s21, 1
      %p102 = por %p100, %p101
      %p103 = scmp.ne.s32.totalorder %s94, %s95
      %p104 = scmp.eq.s32.totalorder %s21, 0
      %p105 = por %p103, %p104
      %p106 = scmp.ne.s32.totalorder %s94, %s95
      %p107 = scmp.eq.s32.totalorder %s22, 1
      %p108 = por %p106, %p107
      %p110 = scmp.ne.s32.totalorder %s95, %s109
      %p111 = scmp.eq.s32.totalorder %s22, 0
      %p112 = por %p110, %p111
      %s113 = ssub.s32 %s16, %s23
      %p114 = scmp.eq.s32.totalorder %s113, 0
      %s116 = sadd.s32 %s115, 1
      %s117 = scalar_select %p114, %s115, %s116
      %p120 = pneg %p114
      %p121 = scmp.eq.s32.totalorder %s16, 1
      %p122 = por %p120, %p121
      %p123 = scmp.ne.s32.totalorder %s115, %s118
      %p124 = scmp.eq.s32.totalorder %s16, 0
      %p125 = por %p123, %p124
      %p126 = scmp.ne.s32.totalorder %s115, %s118
      %p127 = scmp.eq.s32.totalorder %s21, 1
      %p128 = por %p126, %p127
      %p129 = scmp.ne.s32.totalorder %s118, %s119
      %p130 = scmp.eq.s32.totalorder %s21, 0
      %p131 = por %p129, %p130
      %p132 = scmp.ne.s32.totalorder %s118, %s119
      %p133 = scmp.eq.s32.totalorder %s22, 1
      %p134 = por %p132, %p133
      %p136 = scmp.ne.s32.totalorder %s119, %s135
      %p137 = scmp.eq.s32.totalorder %s22, 0
      %p138 = por %p136, %p137
      %p139 = scmp.le.s32.totalorder 1, %s16
      %p140 = scmp.lt.s32.totalorder %s16, 3
      %p141 = pnand %p139, %p140
      %p142 = pneg %p141
      // Predicated region
      $region9: #{tpu_custom_call.1} parent=5 // pred_check
        _
      $region10: #{tpu_custom_call.1} parent=5 // pred_check_branch
        %144 = sbr.rel (%p141) target = $region12
      $region11: #{tpu_custom_call.1} parent=5 // pred_region
        %s145 = ssub.s32 %s16, 1
        // Predicated region
        $region13: #{tpu_custom_call.1} parent=11 // pred_check
          %p146 = pneg %p63
        $region14: #{tpu_custom_call.1} parent=11 // pred_check_branch
          %148 = sbr.rel (%p146) target = $region16
        $region15: #{tpu_custom_call.1} parent=11 // pred_region
          _
        $region16: #{tpu_custom_call.1} parent=11 // pred_fallthru
          _
        // Predicated region
        $region17: #{tpu_custom_call.1} parent=11 // pred_check
          %p149 = pneg %p84
        $region18: #{tpu_custom_call.1} parent=11 // pred_check_branch
          %151 = sbr.rel (%p149) target = $region20
        $region19: #{tpu_custom_call.1} parent=11 // pred_region
          _
        $region20: #{tpu_custom_call.1} parent=11 // pred_fallthru
          _
        // Predicated region
        $region21: #{tpu_custom_call.1} parent=11 // pred_check
          %p152 = pneg %p105
        $region22: #{tpu_custom_call.1} parent=11 // pred_check_branch
          %154 = sbr.rel (%p152) target = $region24
        $region23: #{tpu_custom_call.1} parent=11 // pred_region
          _
        $region24: #{tpu_custom_call.1} parent=11 // pred_fallthru
          _
      $region12: #{tpu_custom_call.1} parent=5 // pred_fallthru
        _
      %p155 = scmp.lt.s32.totalorder %s16, 2
      // Predicated region
      $region25: #{tpu_custom_call.1} parent=5 // pred_check
        %p156 = pneg %p155
      $region26: #{tpu_custom_call.1} parent=5 // pred_check_branch
        %158 = sbr.rel (%p156) target = $region28
      $region27: #{tpu_custom_call.1} parent=5 // pred_region
        // Predicated region
        $region29: #{tpu_custom_call.1} parent=27 // pred_check
          %p159 = pneg %p36
        $region30: #{tpu_custom_call.1} parent=27 // pred_check_branch
          %161 = sbr.rel (%p159) target = $region32
        $region31: #{tpu_custom_call.1} parent=27 // pred_region
          %s162 = sand.u32 %s26, 1
          %s163 = scalar_lea.sflag [#allocation3], %s162
          %s164 = sand.u32 %s26, 1
          %s165 = smul.addr %s164, 24
          %s166 = scalar_lea.vmem [#allocation2], %s165
          %s168 = ssub.s32 384, 384
          %169 = vsyncadd %s163, %s168
          %s170 = smul.addr %s16, 3
          %s171 = smul.addr %s170, 128
          %s172 = scalar_lea.hbm %s0, %s171
          %s174 = sshll.u32 %s166, 4
          %s175 = int_to_ptr.vmem [resolvable:$true] %s174
          %177 = dma.hbm_to_vmem [thread:$0]  %s172, 384, %s175, %s163
        $region32: #{tpu_custom_call.1} parent=27 // pred_fallthru
          _
      $region28: #{tpu_custom_call.1} parent=5 // pred_fallthru
        _
      %p178 = scmp.le.s32.totalorder 1, %s16
      %p179 = scmp.lt.s32.totalorder %s16, 3
      %p180 = pnand %p178, %p179
      %p181 = pneg %p180
      // Predicated region
      $region33: #{tpu_custom_call.1} parent=5 // pred_check
        _
      $region34: #{tpu_custom_call.1} parent=5 // pred_check_branch
        %183 = sbr.rel (%p180) target = $region36
      $region35: #{tpu_custom_call.1} parent=5 // pred_region
        %s184 = ssub.s32 %s16, 1
        %s185 = sand.u32 %s29, 1
        %s186 = scalar_lea.sflag [#allocation3], %s185
        %s187 = sand.u32 %s29, 1
        %s188 = smul.addr %s187, 24
        %s189 = scalar_lea.vmem [#allocation2], %s188
        // Predicated region
        $region37: #{tpu_custom_call.1} parent=35 // pred_check
          %p190 = pneg %p42
        $region38: #{tpu_custom_call.1} parent=35 // pred_check_branch
          %192 = sbr.rel (%p190) target = $region40
        $region39: #{tpu_custom_call.1} parent=35 // pred_region
          %193 = dma.done %s186, 384
        $region40: #{tpu_custom_call.1} parent=35 // pred_fallthru
          _
        %s194 = sand.u32 %s29, 1
        %s195 = scalar_lea.sflag [#allocation3], %s194
        %s196 = sand.u32 %s29, 1
        %s197 = smul.addr %s196, 24
        %s198 = scalar_lea.vmem [#allocation2], %s197
        %p199 = pneg %p42
        %p200 = pneg %p39
        %p201 = pneg %p63
        %p202 = pneg %p60
        %p203 = pneg %p84
        %p204 = pneg %p81
        %p205 = pneg %p105
        %p206 = pneg %p102
        %p207 = pneg %p131
        %p208 = pneg %p128
        %s209 = sand.u32 %s118, 1
        %s210 = scalar_lea.sflag [#allocation4], %s209
        %s211 = sand.u32 %s118, 1
        %s212 = smul.addr %s211, 16
        %s213 = scalar_lea.vmem [#allocation5], %s212
        %v214 = vld [vmem:[%s189] sm:$0xff]
        %v215 = vld [vmem:[%s189 + $0x8] sm:$0xff]
        %v216 = vld [vmem:[%s189] sm:$0xff]
        %v217 = vld [vmem:[%s189 + $0x8] sm:$0xff]
        %v218 = vld [vmem:[%s189 + $0x10] sm:$0xff]
        %222 = vrot.lane.b32.xlu0 %v216, 127
        %v223 = vpop.permute.xlu0 %222
        %224 = vrot.lane.b32.xlu0 %v217, 127
        %v225 = vpop.permute.xlu0 %224
        %226 = vrot.lane.b32.xlu0 %v218, 127
        %v227 = vpop.permute.xlu0 %226
        %vm228 = vcmask 1039360
        %v229 = vsel %vm228, %v223, %v225
        %v230 = vsel %vm228, %v225, %v227
        %233 = vrot.lane.b32.xlu0 %v216, 126
        %v234 = vpop.permute.xlu0 %233
        %235 = vrot.lane.b32.xlu0 %v217, 126
        %v236 = vpop.permute.xlu0 %235
        %237 = vrot.lane.b32.xlu0 %v218, 126
        %v238 = vpop.permute.xlu0 %237
        %vm239 = vcmask 1031168
        %v240 = vsel %vm239, %v234, %v236
        %v241 = vsel %vm239, %v236, %v238
        %244 = vrot.lane.b32.xlu0 %v216, 112
        %v245 = vpop.permute.xlu0 %244
        %246 = vrot.lane.b32.xlu0 %v217, 112
        %v247 = vpop.permute.xlu0 %246
        %248 = vrot.lane.b32.xlu0 %v218, 112
        %v249 = vpop.permute.xlu0 %248
        %vm250 = vcmask 916480
        %v251 = vsel %vm250, %v245, %v247
        %v252 = vsel %vm250, %v247, %v249
        %255 = vrot.lane.b32.xlu0 %v216, 111
        %v256 = vpop.permute.xlu0 %255
        %257 = vrot.lane.b32.xlu0 %v217, 111
        %v258 = vpop.permute.xlu0 %257
        %259 = vrot.lane.b32.xlu0 %v218, 111
        %v260 = vpop.permute.xlu0 %259
        %vm261 = vcmask 908288
        %v262 = vsel %vm261, %v256, %v258
        %v263 = vsel %vm261, %v258, %v260
        %266 = vrot.lane.b32.xlu0 %v216, 110
        %v267 = vpop.permute.xlu0 %266
        %268 = vrot.lane.b32.xlu0 %v217, 110
        %v269 = vpop.permute.xlu0 %268
        %270 = vrot.lane.b32.xlu0 %v218, 110
        %v271 = vpop.permute.xlu0 %270
        %vm272 = vcmask 900096
        %v273 = vsel %vm272, %v267, %v269
        %v274 = vsel %vm272, %v269, %v271
        %277 = vrot.lane.b32.xlu0 %v216, 96
        %v278 = vpop.permute.xlu0 %277
        %279 = vrot.lane.b32.xlu0 %v217, 96
        %v280 = vpop.permute.xlu0 %279
        %281 = vrot.lane.b32.xlu0 %v218, 96
        %v282 = vpop.permute.xlu0 %281
        %vm283 = vcmask 785408
        %v284 = vsel %vm283, %v278, %v280
        %v285 = vsel %vm283, %v280, %v282
        %288 = vrot.lane.b32.xlu0 %v216, 95
        %v289 = vpop.permute.xlu0 %288
        %290 = vrot.lane.b32.xlu0 %v217, 95
        %v291 = vpop.permute.xlu0 %290
        %292 = vrot.lane.b32.xlu0 %v218, 95
        %v293 = vpop.permute.xlu0 %292
        %vm294 = vcmask 777216
        %v295 = vsel %vm294, %v289, %v291
        %v296 = vsel %vm294, %v291, %v293
        %299 = vrot.lane.b32.xlu0 %v216, 94
        %v300 = vpop.permute.xlu0 %299
        %301 = vrot.lane.b32.xlu0 %v217, 94
        %v302 = vpop.permute.xlu0 %301
        %303 = vrot.lane.b32.xlu0 %v218, 94
        %v304 = vpop.permute.xlu0 %303
        %vm305 = vcmask 769024
        %v306 = vsel %vm305, %v300, %v302
        %v307 = vsel %vm305, %v302, %v304
        %v310 = vld [vmem:[%s1] sm:$0xff]
        %vm311 = vcmask 588800
        %v313 = vsel %vm311, %v310, 0
        %315 = vmatprep.subr.mxu0 %v215
        %316 = vmatpush1.msra.mxu0 %v214
        %317 = vmatprep.subr.mxu0 %v230
        %318 = vmatpush1.msra.mxu0 %v229
        %319 = vmatprep.subr.mxu0 %v241
        %320 = vmatpush1.msra.mxu0 %v240
        %321 = vmatprep.subr.mxu0 %v252
        %322 = vmatpush1.msra.mxu0 %v251
        %323 = vmatprep.subr.mxu0 %v263
        %324 = vmatpush1.msra.mxu0 %v262
        %325 = vmatprep.subr.mxu0 %v274
        %326 = vmatpush1.msra.mxu0 %v273
        %327 = vmatprep.subr.mxu0 %v285
        %328 = vmatpush1.msra.mxu0 %v284
        %329 = vmatprep.subr.mxu0 %v296
        %330 = vmatpush1.msra.mxu0 %v295
        %331 = vmatprep.subr.mxu0 %v307
        %332 = vmatpush1.msra.mxu0 %v306
        %333 = vmatprep.subr.mxu0 0.0
        %334 = vmatpush1.msra.mxu0 0.0
        %335 = vmatprep.subr.mxu0 0.0
        %336 = vmatpush1.msra.mxu0 0.0
        %337 = vmatprep.subr.mxu0 0.0
        %338 = vmatpush1.msra.mxu0 0.0
        %339 = vmatprep.subr.mxu0 0.0
        %340 = vmatpush1.msra.mxu0 0.0
        %341 = vmatprep.subr.mxu0 0.0
        %342 = vmatpush1.msra.mxu0 0.0
        %343 = vmatprep.subr.mxu0 0.0
        %344 = vmatpush1.msra.mxu0 0.0
        %345 = vmatprep.subr.mxu0 0.0
        %346 = vmatpush1.msra.mxu0 0.0
        %347 = vmatprep.subr.mxu0 0.0
        %348 = vmatpush1.msra.mxu0 0.0
        %349 = vmatprep.subr.mxu0 0.0
        %350 = vmatpush1.msra.mxu0 0.0
        %351 = vmatprep.subr.mxu0 0.0
        %352 = vmatpush1.msra.mxu0 0.0
        %353 = vmatprep.subr.mxu0 0.0
        %354 = vmatpush1.msra.mxu0 0.0
        %355 = vmatprep.subr.mxu0 0.0
        %356 = vmatpush1.msra.mxu0 0.0
        %357 = vmatprep.subr.mxu0 0.0
        %358 = vmatpush1.msra.mxu0 0.0
        %359 = vmatprep.subr.mxu0 0.0
        %360 = vmatpush1.msra.mxu0 0.0
        %361 = vmatprep.subr.mxu0 0.0
        %362 = vmatpush1.msra.mxu0 0.0
        %363 = vmatprep.subr.mxu0 0.0
        %364 = vmatpush1.msra.mxu0 0.0
        %365 = vmatprep.subr.mxu0 0.0
        %366 = vmatpush1.msra.mxu0 0.0
        %367 = vmatprep.subr.mxu0 0.0
        %368 = vmatpush1.msra.mxu0 0.0
        %369 = vmatprep.subr.mxu0 0.0
        %370 = vmatpush1.msra.mxu0 0.0
        %371 = vmatprep.subr.mxu0 0.0
        %372 = vmatpush1.msra.mxu0 0.0
        %373 = vmatprep.subr.mxu0 0.0
        %374 = vmatpush1.msra.mxu0 0.0
        %375 = vmatprep.subr.mxu0 0.0
        %376 = vmatpush1.msra.mxu0 0.0
        %377 = vmatprep.subr.mxu0 0.0
        %378 = vmatpush1.msra.mxu0 0.0
        %379 = vmatprep.mubr.f32.mxu0 0.0
        %380 = vmatmul.mubr.f32.gmra.mrb[0].mxu0 %v313
        %v381 = vpop.f32.mrb[0].mxu0
        %v382 = vadd.f32 0.0, %v381
        %v383 = vpop.f32.mrb[0].mxu0
        %v384 = vadd.f32 0.0, %v383
        %385 = vdwg.mxu0
        %v386 = vlaneseq
        %v387 = vand.u32 %v386, 127
        %v388 = vadd.s32 %v387, 128
        %vm389 = vcmp.lt.s32.totalorder %v387, 224
        %vm390 = vcmp.lt.s32.totalorder %v388, 224
        %vm391 = vcmp.lt.s32.totalorder %v387, 0
        %v392 = vsub.s32 0, %v387
        %v393 = vsel %vm391, %v392, %v387
        %v394 = vshrl.u32 %v393, 4
        %v395 = vand.u32 %v393, 15
        %v396 = vsub.s32 0, %v395
        %v397 = vsel %vm391, %v396, %v395
        %vm398 = vcmp.lt.s32.totalorder %v388, 0
        %v399 = vsub.s32 0, %v388
        %v400 = vsel %vm398, %v399, %v388
        %v401 = vshrl.u32 %v400, 4
        %v402 = vand.u32 %v400, 15
        %v403 = vsub.s32 0, %v402
        %v404 = vsel %vm398, %v403, %v402
        %vm405 = vcmp.ne.s32.totalorder %v397, 0
        %vm406 = vcmp.ne.s32.totalorder %v404, 0
        %vm407 = vcmp.lt.s32.totalorder %v397, 0
        %vm408 = vcmp.lt.s32.totalorder %v404, 0
        %vm409 = vmand %vm407, %vm405
        %vm410 = vmand %vm408, %vm406
        %v411 = vadd.s32 %v397, 16
        %v412 = vadd.s32 %v404, 16
        %v413 = vsel %vm409, %v411, %v397
        %v414 = vsel %vm410, %v412, %v404
        %vm415 = vcmp.lt.s32.totalorder %v413, 14
        %vm416 = vcmp.lt.s32.totalorder %v414, 14
        %vm417 = vmand %vm389, %vm415
        %vm418 = vmand %vm390, %vm416
        %v419 = vsel %vm417, 1, 0
        %v420 = vsel %vm418, 1, 0
        %v421 = vcvt.s32.f32 %v419
        %v422 = vcvt.s32.f32 %v420
        %v423 = vmul.f32 %v382, %v421
        %v424 = vmul.f32 %v384, %v422
        %v425 = vadd.f32 %v423, %v424
        %426 = vadd.xlane.f32.xlu0 %v425
        %v427 = vpop.xlane.xlu0 %426
        %v428 = vmul.f32 %v423, %v382
        %v429 = vmul.f32 %v424, %v384
        %v430 = vadd.f32 %v428, %v429
        %431 = vadd.xlane.f32.xlu0 %v430
        %v432 = vpop.xlane.xlu0 %431
        %v433 = vmul.f32 %v427, 0.0051020407
        %v434 = vmul.f32 %v432, 0.0051020407
        %v435 = vmul.f32 %v433, %v433
        %v436 = vsub.f32 %v434, %v435
        %v437 = vmax.f32 %v436, 0.0
        %v438 = vld [vmem:[%s2] sm:$0xff]
        %v439 = vadd.f32 %v437, 1e-05
        %v440 = vrsqrt.pop %v439
        %v441 = vmul.f32 %v438, %v440
        %v442 = vld [vmem:[%s3] sm:$0xff]
        %v443 = vmul.f32 %v433, %v441
        %v444 = vsub.f32 %v442, %v443
        %446 = vset.pattern.permute.xlu0 0
        %447 = vperm.xlu0 %446, %v441
        %v448 = vpop.permute.xlu0 %447
        %v450 = vmul.f32 %v382, %v448
        %v451 = vmul.f32 %v384, %v448
        %453 = vset.pattern.permute.xlu0 0
        %454 = vperm.xlu0 %453, %v444
        %v455 = vpop.permute.xlu0 %454
        %v457 = vadd.f32 %v450, %v455
        %v458 = vadd.f32 %v451, %v455
        %459 = vst [vmem:[%s213] sm:$0xff] %v457
        %460 = vst [vmem:[%s213 + $0x8] sm:$0xff] %v458
        %s461 = sand.u32 %s118, 1
        %s462 = scalar_lea.sflag [#allocation4], %s461
        %s463 = sand.u32 %s118, 1
        %s464 = smul.addr %s463, 16
        %s465 = scalar_lea.vmem [#allocation5], %s464
        // Predicated region
        $region41: #{tpu_custom_call.1} parent=35 // pred_check
          %p466 = pneg %p128
        $region42: #{tpu_custom_call.1} parent=35 // pred_check_branch
          %468 = sbr.rel (%p466) target = $region44
        $region43: #{tpu_custom_call.1} parent=35 // pred_region
          %s470 = ssub.s32 256, 256
          %471 = vsyncadd %s462, %s470
          %s472 = smul.addr %s21, 2
          %s473 = smul.addr %s472, 128
          %s474 = scalar_lea.hbm %s4, %s473
          %s476 = sshll.u32 %s465, 4
          %s477 = int_to_ptr.vmem [resolvable:$true] %s476
          %479 = dma.vmem_to_hbm [thread:$0]  %s477, 256, %s474, %s462
        $region44: #{tpu_custom_call.1} parent=35 // pred_fallthru
          _
      $region36: #{tpu_custom_call.1} parent=5 // pred_fallthru
        _
      %p480 = scmp.le.s32.totalorder 2, %s16
      // Predicated region
      $region45: #{tpu_custom_call.1} parent=5 // pred_check
        %p481 = pneg %p480
      $region46: #{tpu_custom_call.1} parent=5 // pred_check_branch
        %483 = sbr.rel (%p481) target = $region48
      $region47: #{tpu_custom_call.1} parent=5 // pred_region
        %s484 = ssub.s32 %s16, 2
        // Predicated region
        $region49: #{tpu_custom_call.1} parent=47 // pred_check
          %p485 = pneg %p134
        $region50: #{tpu_custom_call.1} parent=47 // pred_check_branch
          %487 = sbr.rel (%p485) target = $region52
        $region51: #{tpu_custom_call.1} parent=47 // pred_region
          %s488 = sand.u32 %s119, 1
          %s489 = scalar_lea.sflag [#allocation4], %s488
          %s490 = sand.u32 %s119, 1
          %s491 = smul.addr %s490, 16
          %s492 = scalar_lea.vmem [#allocation5], %s491
          %493 = dma.done %s489, 256
        $region52: #{tpu_custom_call.1} parent=47 // pred_fallthru
          _
      $region48: #{tpu_custom_call.1} parent=5 // pred_fallthru
        _
    $region6: #{tpu_custom_call.1} parent=1 // loop_footer
      %s20 = sadd.s32 1, %s16
    $region7: #{tpu_custom_call.1} parent=1 // loop_footer_branch
      %15 = sbr.rel target = $region3
    $region8: #{tpu_custom_call.1} parent=1 // loop_exit
      _
    %494 = vsyncpa [#allocation3], 1
    %s495 = scalar_lea.sflag [#allocation3], 1
    %496 = vsyncpa %s495, 1
    %497 = vsyncpa [#allocation4], 1
    %s498 = scalar_lea.sflag [#allocation4], 1
    %499 = vsyncpa %s498, 1

</llo_original>
